<compile_context>
chip_gen: v7x
topology: tpu7x:2x2x1
jax: 0.10.0
libtpu: 0.0.40
codegen_flags: <defaults>
</compile_context>

<pallas_src>
import jax
import jax.numpy as jnp
from jax.experimental import pallas as pl
from jax.experimental.pallas import tpu as pltpu


def _round_up(x, m):
    return ((x + m - 1) // m) * m


def _vmem_limits():
    """Generation-aware (scoped vmem_limit_bytes, double-buffered x-stream budget)."""
    cap = None
    try:
        info = pltpu.get_tpu_info()
        cap = getattr(info, "vmem_capacity_bytes", None)
    except Exception:
        cap = None
    if cap is None:
        # Unknown generation: stay within v7x's 64 MiB per-TensorCore VMEM.
        scoped = 48 * 1024 * 1024
    else:
        # v5e/v6e (128 MiB) -> ~100 MiB scoped; v7x (64 MiB/TC) -> ~52 MiB scoped.
        scoped = min(int(cap) - 12 * 1024 * 1024, 100 * 1024 * 1024)
        scoped = max(scoped, 16 * 1024 * 1024)
    # Leave slack for the resident weight, output double-buffer and compiler scratch.
    x_budget = max(scoped - 8 * 1024 * 1024, 8 * 1024 * 1024)
    return scoped, x_budget


def _choose_block_m(batch, n_feature, x_itemsize, x_stream_budget):
    """Largest 128-row batch tile whose double-buffered (BM, F) x tile fits the
    budget, capped so the batch splits into >=2 grid steps when possible
    (keeps both v7x TensorCores busy)."""
    bm = x_stream_budget // (2 * n_feature * x_itemsize)
    bm = max(128, min(8192, (bm // 128) * 128))
    rows = _round_up(batch, 128)
    if rows >= 256:
        half = _round_up(rows // 2, 128)
        bm = min(bm, half)          # guarantees grid_m >= 2 for multi-block batches
    else:
        bm = min(bm, rows)          # tiny batch: one 128-row (partial) block
    return bm


def _linear_kernel(x_ref, w_ref, b_ref, o_ref):
    # x_ref: (BM, F) VMEM, native dtype   w_ref: (1, F) f32 VMEM
    # b_ref: (1,)    f32  SMEM            o_ref: (BM, 1) f32 VMEM
    x = x_ref[...].astype(jnp.float32)
    # VPU multiply + XLU lane-reduce; never transposes/copies the streamed x tile,
    # so the per-step cost is hidden entirely under the next tile's DMA.
    y = jnp.sum(x * w_ref[...], axis=-1, keepdims=True)
    o_ref[...] = (y + b_ref[0]).astype(o_ref.dtype)


def linear_net_pallas(x, weight, bias, *, block_m=None):
    """y = x @ weight.T + bias via the Pallas kernel.

    x:      (batch, n_feature)  any float dtype (consumed in place, accumulated f32)
    weight: (1, n_feature)      (PyTorch nn.Linear layout, kept lane-dense)
    bias:   (1,)
    returns (batch, 1) float32
    """
    batch, n_feature = x.shape
    w = weight.reshape(1, n_feature).astype(jnp.float32)
    b = bias.reshape(1).astype(jnp.float32)

    scoped_vmem, x_budget = _vmem_limits()
    x_itemsize = x.dtype.itemsize

    # TODO(synk): no feature-axis (K) tiling; if even a 128-row double-buffered
    # x tile can't fit the VMEM budget (n_feature in the several-hundred-thousand
    # range), fall back to plain XLA instead of adding a K reduction grid axis.
    if x_budget // (2 * n_feature * x_itemsize) < 128:
        return (x.astype(jnp.float32) @ w.T + b).astype(jnp.float32)

    if block_m is None:
        block_m = _choose_block_m(batch, n_feature, x_itemsize, x_budget)

    grid_m = pl.cdiv(batch, block_m)   # partial last block; no jnp.pad, no astype pass

    out = pl.pallas_call(
        _linear_kernel,
        out_shape=jax.ShapeDtypeStruct((batch, 1), jnp.float32),
        grid_spec=pltpu.PrefetchScalarGridSpec(
            num_scalar_prefetch=0,
            grid=(grid_m,),
            in_specs=[
                pl.BlockSpec((block_m, n_feature), lambda i: (i, 0)),   # streamed x tile
                pl.BlockSpec((1, n_feature), lambda i: (0, 0)),         # resident weight
                pl.BlockSpec(memory_space=pltpu.MemorySpace.SMEM),      # scalar bias
            ],
            out_specs=pl.BlockSpec((block_m, 1), lambda i: (i, 0)),
        ),
        compiler_params=pltpu.CompilerParams(
            dimension_semantics=("parallel",),
            vmem_limit_bytes=scoped_vmem,
        ),
        cost_estimate=pl.CostEstimate(
            flops=2 * batch * n_feature,
            bytes_accessed=batch * n_feature * x_itemsize + 4 * n_feature + 4 * batch + 4,
            transcendentals=0,
        ),
    )(x, w, b)
    return out


def linear_net(x, weight, bias):
    """LinearNet forward. Tiny problems go to plain XLA (launch overhead dominates);
    large ones use the Pallas kernel."""
    batch, n_feature = x.shape
    if batch * n_feature * x.dtype.itemsize < (1 << 20):   # < 1 MiB of input
        w = weight.reshape(1, n_feature).astype(jnp.float32)
        b = bias.reshape(1).astype(jnp.float32)
        return x.astype(jnp.float32) @ w.T + b
    return linear_net_pallas(x, weight, bias)


if __name__ == "__main__":
    n_feature = 32
    batch = 8

    key = jax.random.PRNGKey(0)
    kx, kw, kb = jax.random.split(key, 3)

    # Deterministic params mimicking PyTorch nn.Linear default init:
    # uniform(-1/sqrt(n_feature), 1/sqrt(n_feature)).
    bound = 1.0 / (n_feature ** 0.5)
    weight = jax.random.uniform(kw, (1, n_feature), jnp.float32, -bound, bound)
    bias = jax.random.uniform(kb, (1,), jnp.float32, -bound, bound)

    x = jax.random.normal(kx, (batch, n_feature), jnp.float32)

    # Call the Pallas path directly so the kernel is actually exercised
    # (the dispatcher would route this toy shape to XLA).
    y = linear_net_pallas(x, weight, bias)
    y = jax.block_until_ready(y)

    # Reference check in plain JAX (same math as torch.nn.Linear).
    y_ref = x @ weight.T + bias
    assert y.shape == (batch, 1)
    assert jnp.allclose(y, y_ref, atol=1e-5, rtol=1e-5)

    print("KERNEL_OK")
</pallas_src>

<mosaic_0001>
module attributes {stable_mosaic.version = 11 : i64} {
  func.func @_linear_kernel(%arg0: i32, %arg1: memref<128x32xf32, #tpu.memory_space<vmem>>, %arg2: memref<1x32xf32, #tpu.memory_space<vmem>>, %arg3: memref<1xf32, #tpu.memory_space<smem>>, %arg4: memref<128x1xf32, #tpu.memory_space<vmem>>) attributes {dimension_semantics = [#tpu.dimension_semantics<parallel>], iteration_bounds = array<i64: 1>, scalar_prefetch = 0 : i64, scratch_operands = 0 : i64, tpu.core_type = #tpu.core_type<tc>, window_params = [{transform_indices = @transform_0, window_bounds = array<i64: 128, 32>}, {pipeline_mode = #tpu.pipeline_mode<synchronous>, transform_indices = @transform_1, window_bounds = array<i64: 1, 32>}, {transform_indices = @transform_2, window_bounds = array<i64: 1>}, {transform_indices = @transform_3, window_bounds = array<i64: 128, 1>}]} {
    %c0 = arith.constant 0 : index
    %c0_0 = arith.constant 0 : index
    %0 = vector.load %arg1[%c0, %c0_0] : memref<128x32xf32, #tpu.memory_space<vmem>>, vector<128x32xf32>
    %c0_1 = arith.constant 0 : index
    %c0_2 = arith.constant 0 : index
    %1 = vector.load %arg2[%c0_1, %c0_2] : memref<1x32xf32, #tpu.memory_space<vmem>>, vector<1x32xf32>
    %2 = vector.broadcast %1 : vector<1x32xf32> to vector<128x32xf32>
    %3 = arith.mulf %0, %2 : vector<128x32xf32>
    %cst = arith.constant dense<0.000000e+00> : vector<128xf32>
    %4 = vector.multi_reduction <add>, %3, %cst [1] : vector<128x32xf32> to vector<128xf32>
    %5 = vector.shape_cast %4 : vector<128xf32> to vector<128x1xf32>
    %c0_3 = arith.constant 0 : index
    %6 = memref.load %arg3[%c0_3] : memref<1xf32, #tpu.memory_space<smem>>
    %7 = vector.broadcast %6 : f32 to vector<128x1xf32>
    %8 = arith.addf %5, %7 : vector<128x1xf32>
    %c0_4 = arith.constant 0 : index
    %c0_5 = arith.constant 0 : index
    %9 = vector.load %arg4[%c0_4, %c0_5] : memref<128x1xf32, #tpu.memory_space<vmem>>, vector<128x1xf32>
    tpu.vector_store %arg4[%c0_4, %c0_5], %8 {strides = array<i32>} : memref<128x1xf32, #tpu.memory_space<vmem>>, vector<128x1xf32>,
    return
  }
  func.func @transform_0(%arg0: i32) -> (i32, i32) {
    %c0_i32 = arith.constant 0 : i32
    %c0_i32_0 = arith.constant 0 : i32
    return %arg0, %c0_i32 : i32, i32
  }
  func.func @transform_1(%arg0: i32) -> (i32, i32) {
    %c0_i32 = arith.constant 0 : i32
    %c0_i32_0 = arith.constant 0 : i32
    %c0_i32_1 = arith.constant 0 : i32
    return %c0_i32, %c0_i32_0 : i32, i32
  }
  func.func @transform_2(%arg0: i32) -> i32 {
    %c0_i32 = arith.constant 0 : i32
    %c0_i32_0 = arith.constant 0 : i32
    return %c0_i32 : i32
  }
  func.func @transform_3(%arg0: i32) -> (i32, i32) {
    %c0_i32 = arith.constant 0 : i32
    %c0_i32_0 = arith.constant 0 : i32
    return %arg0, %c0_i32 : i32, i32
  }
}

</mosaic_0001>

<llo_original>
// kernel: tpu_custom_call.1
$region0: #{tpu_custom_call.1}
  #allocation0 [shape = 'u32[]', space=smem, size = 0x4, offset = 0x4, fixed_abs, tag = 'smem constant byte address 0x4 - core index']
  #allocation1 [shape = 'u32[144,128]{1,0:T(1,128)}', space=vmem, size = 0x12000, scoped, tag = 'internal scratch']
  #allocation2 [shape = 'f32[1]{0:T(128)S(6)}', space=smem, size = 0x200, scoped, tag = 'scoped memory for tpu_custom_call.1']
  %s0 = inlined_call_operand.hbm [shape: f32[8,32], index: 0, kind: input, shape index: {}]
  %s1 = inlined_call_operand.vmem [shape: f32[1,32], index: 1, kind: input, shape index: {}]
  %s2 = inlined_call_operand.<no memory space> [shape: f32[1], index: 2, kind: input, shape index: {}]
  %s3 = inlined_call_operand.vmem [shape: f32[8,1], index: 3, kind: output, shape index: {}]
  %s4 = sld [smem:[#allocation0]]
  $region60: #{tpu_custom_call.1} parent=0
    _
  %s6 = ssub.s32 1, %s4
  %s7 = scalar_select 0, %s6, %s4
  %8 = sst [smem:[#allocation2]] %s2
  $region1: #{tpu_custom_call.1} parent=0
    #allocation3 [shape = 'u8[65536]{0}', space=vmem, size = 0x10000, scoped, tag = 'input window, operand 0, single buffered']
    #allocation4 [shape = 's32[1]{0}', space=sflag, size = 0x4, scoped, tag = 'scoped memory for tpu_custom_call.1']
    #allocation5 [shape = 'u8[65536]{0}', space=vmem, size = 0x10000, scoped, tag = 'output window, operand 0, single buffered']
    %9 = vsyncpa [#allocation4], 0
    // Predicated region
    $region2: #{tpu_custom_call.1} parent=1 // pred_check
      _
    $region3: #{tpu_custom_call.1} parent=1 // pred_check_branch
      %11 = sbr.rel (0) target = $region5
    $region4: #{tpu_custom_call.1} parent=1 // pred_region
      %s13 = ssub.s32 2048, 128
      %14 = vsyncadd [#allocation4], %s13
      %s15 = sshll.u32 [#allocation3], 4
      %s16 = int_to_ptr.vmem [resolvable:$true] %s15
      %21 = dma.hbm_to_vmem [thread:$0]  %s0, 128, %s16, [#allocation4], 128, 128, 8
    $region5: #{tpu_custom_call.1} parent=1 // pred_fallthru
      _
    // Predicated region
    $region6: #{tpu_custom_call.1} parent=1 // pred_check
      _
    $region7: #{tpu_custom_call.1} parent=1 // pred_check_branch
      %23 = sbr.rel (0) target = $region9
    $region8: #{tpu_custom_call.1} parent=1 // pred_region
      _
    $region9: #{tpu_custom_call.1} parent=1 // pred_fallthru
      _
    // Predicated region
    $region10: #{tpu_custom_call.1} parent=1 // pred_check
      _
    $region11: #{tpu_custom_call.1} parent=1 // pred_check_branch
      %25 = sbr.rel (0) target = $region13
    $region12: #{tpu_custom_call.1} parent=1 // pred_region
      _
    $region13: #{tpu_custom_call.1} parent=1 // pred_fallthru
      _
    // Predicated region
    $region14: #{tpu_custom_call.1} parent=1 // pred_check
      _
    $region15: #{tpu_custom_call.1} parent=1 // pred_check_branch
      %27 = sbr.rel (0) target = $region17
    $region16: #{tpu_custom_call.1} parent=1 // pred_region
      %28 = dma.done [#allocation4], 2048
    $region17: #{tpu_custom_call.1} parent=1 // pred_fallthru
      _
    %v29 = vld [vmem:[#allocation3] sm:$0xff]
    %v30 = vld [vmem:[#allocation3 + $0x8] sm:$0xff]
    %v31 = vld [vmem:[#allocation3 + $0x10] sm:$0xff]
    %v32 = vld [vmem:[#allocation3 + $0x18] sm:$0xff]
    %v33 = vld [vmem:[#allocation3 + $0x20] sm:$0xff]
    %v34 = vld [vmem:[#allocation3 + $0x28] sm:$0xff]
    %v35 = vld [vmem:[#allocation3 + $0x30] sm:$0xff]
    %v36 = vld [vmem:[#allocation3 + $0x38] sm:$0xff]
    %v37 = vld [vmem:[#allocation3 + $0x40] sm:$0xff]
    %v38 = vld [vmem:[#allocation3 + $0x48] sm:$0xff]
    %v39 = vld [vmem:[#allocation3 + $0x50] sm:$0xff]
    %v40 = vld [vmem:[#allocation3 + $0x58] sm:$0xff]
    %v41 = vld [vmem:[#allocation3 + $0x60] sm:$0xff]
    %v42 = vld [vmem:[#allocation3 + $0x68] sm:$0xff]
    %v43 = vld [vmem:[#allocation3 + $0x70] sm:$0xff]
    %v44 = vld [vmem:[#allocation3 + $0x78] sm:$0xff]
    %v45 = vld [vmem:[%s1] sm:$0x1]
    %v47 = vlaneseq
    %v48 = vshrl.u32 %v47, 7
    %v49 = vsub.s32 0, %v48
    %v50 = vrot.slane %v45, %v49
    %v52 = vmul.f32 %v29, %v50
    %v53 = vmul.f32 %v30, %v50
    %v54 = vmul.f32 %v31, %v50
    %v55 = vmul.f32 %v32, %v50
    %v56 = vmul.f32 %v33, %v50
    %v57 = vmul.f32 %v34, %v50
    %v58 = vmul.f32 %v35, %v50
    %v59 = vmul.f32 %v36, %v50
    %v60 = vmul.f32 %v37, %v50
    %v61 = vmul.f32 %v38, %v50
    %v62 = vmul.f32 %v39, %v50
    %v63 = vmul.f32 %v40, %v50
    %v64 = vmul.f32 %v41, %v50
    %v65 = vmul.f32 %v42, %v50
    %v66 = vmul.f32 %v43, %v50
    %v67 = vmul.f32 %v44, %v50
    %vm68 = vcmask 261120
    %v69 = vsel %vm68, %v52, 0.0
    %70 = vadd.xlane.f32.xlu0 %v69
    %v71 = vpop.xlane.xlu0 %70
    %v72 = vsel %vm68, %v53, 0.0
    %73 = vadd.xlane.f32.xlu0 %v72
    %v74 = vpop.xlane.xlu0 %73
    %v75 = vsel %vm68, %v54, 0.0
    %76 = vadd.xlane.f32.xlu0 %v75
    %v77 = vpop.xlane.xlu0 %76
    %v78 = vsel %vm68, %v55, 0.0
    %79 = vadd.xlane.f32.xlu0 %v78
    %v80 = vpop.xlane.xlu0 %79
    %v81 = vsel %vm68, %v56, 0.0
    %82 = vadd.xlane.f32.xlu0 %v81
    %v83 = vpop.xlane.xlu0 %82
    %v84 = vsel %vm68, %v57, 0.0
    %85 = vadd.xlane.f32.xlu0 %v84
    %v86 = vpop.xlane.xlu0 %85
    %v87 = vsel %vm68, %v58, 0.0
    %88 = vadd.xlane.f32.xlu0 %v87
    %v89 = vpop.xlane.xlu0 %88
    %v90 = vsel %vm68, %v59, 0.0
    %91 = vadd.xlane.f32.xlu0 %v90
    %v92 = vpop.xlane.xlu0 %91
    %v93 = vsel %vm68, %v60, 0.0
    %94 = vadd.xlane.f32.xlu0 %v93
    %v95 = vpop.xlane.xlu0 %94
    %v96 = vsel %vm68, %v61, 0.0
    %97 = vadd.xlane.f32.xlu0 %v96
    %v98 = vpop.xlane.xlu0 %97
    %v99 = vsel %vm68, %v62, 0.0
    %100 = vadd.xlane.f32.xlu0 %v99
    %v101 = vpop.xlane.xlu0 %100
    %v102 = vsel %vm68, %v63, 0.0
    %103 = vadd.xlane.f32.xlu0 %v102
    %v104 = vpop.xlane.xlu0 %103
    %v105 = vsel %vm68, %v64, 0.0
    %106 = vadd.xlane.f32.xlu0 %v105
    %v107 = vpop.xlane.xlu0 %106
    %v108 = vsel %vm68, %v65, 0.0
    %109 = vadd.xlane.f32.xlu0 %v108
    %v110 = vpop.xlane.xlu0 %109
    %v111 = vsel %vm68, %v66, 0.0
    %112 = vadd.xlane.f32.xlu0 %v111
    %v113 = vpop.xlane.xlu0 %112
    %v114 = vsel %vm68, %v67, 0.0
    %115 = vadd.xlane.f32.xlu0 %v114
    %v116 = vpop.xlane.xlu0 %115
    %s117 = sld [smem:[#allocation2]]
    %v118 = vstv %s117
    %v119 = vadd.f32 %v71, %v118
    %v120 = vadd.f32 %v74, %v118
    %v121 = vadd.f32 %v77, %v118
    %v122 = vadd.f32 %v80, %v118
    %v123 = vadd.f32 %v83, %v118
    %v124 = vadd.f32 %v86, %v118
    %v125 = vadd.f32 %v89, %v118
    %v126 = vadd.f32 %v92, %v118
    %v127 = vadd.f32 %v95, %v118
    %v128 = vadd.f32 %v98, %v118
    %v129 = vadd.f32 %v101, %v118
    %v130 = vadd.f32 %v104, %v118
    %v131 = vadd.f32 %v107, %v118
    %v132 = vadd.f32 %v110, %v118
    %v133 = vadd.f32 %v113, %v118
    %v134 = vadd.f32 %v116, %v118
    %vm135 = vcmask 7168
    %136 = vst.msk [vmem:[#allocation5] sm:$0xff] %vm135, %v119
    %137 = vst.msk [vmem:[#allocation5 + $0x8] sm:$0xff] %vm135, %v120
    %138 = vst.msk [vmem:[#allocation5 + $0x10] sm:$0xff] %vm135, %v121
    %139 = vst.msk [vmem:[#allocation5 + $0x18] sm:$0xff] %vm135, %v122
    %140 = vst.msk [vmem:[#allocation5 + $0x20] sm:$0xff] %vm135, %v123
    %141 = vst.msk [vmem:[#allocation5 + $0x28] sm:$0xff] %vm135, %v124
    %142 = vst.msk [vmem:[#allocation5 + $0x30] sm:$0xff] %vm135, %v125
    %143 = vst.msk [vmem:[#allocation5 + $0x38] sm:$0xff] %vm135, %v126
    %144 = vst.msk [vmem:[#allocation5 + $0x40] sm:$0xff] %vm135, %v127
    %145 = vst.msk [vmem:[#allocation5 + $0x48] sm:$0xff] %vm135, %v128
    %146 = vst.msk [vmem:[#allocation5 + $0x50] sm:$0xff] %vm135, %v129
    %147 = vst.msk [vmem:[#allocation5 + $0x58] sm:$0xff] %vm135, %v130
    %148 = vst.msk [vmem:[#allocation5 + $0x60] sm:$0xff] %vm135, %v131
    %149 = vst.msk [vmem:[#allocation5 + $0x68] sm:$0xff] %vm135, %v132
    %150 = vst.msk [vmem:[#allocation5 + $0x70] sm:$0xff] %vm135, %v133
    %151 = vst.msk [vmem:[#allocation5 + $0x78] sm:$0xff] %vm135, %v134
    // Predicated region
    $region18: #{tpu_custom_call.1} parent=1 // pred_check
      _
    $region19: #{tpu_custom_call.1} parent=1 // pred_check_branch
      %153 = sbr.rel (0) target = $region21
    $region20: #{tpu_custom_call.1} parent=1 // pred_region
      // Predicated region
      $region22: #{tpu_custom_call.1} parent=20 // pred_check
        _
      $region23: #{tpu_custom_call.1} parent=20 // pred_check_branch
        %155 = sbr.rel (0) target = $region25
      $region24: #{tpu_custom_call.1} parent=20 // pred_region
        // Predicated region
        $region26: #{tpu_custom_call.1} parent=24 // pred_check
          _
        $region27: #{tpu_custom_call.1} parent=24 // pred_check_branch
          %157 = sbr.rel (0) target = $region29
        $region28: #{tpu_custom_call.1} parent=24 // pred_region
          // Predicated region
          $region41: #{tpu_custom_call.1} parent=28 // pred_check
            _
          $region42: #{tpu_custom_call.1} parent=28 // pred_check_branch
            %172 = sbr.rel (0) target = $region44
          $region43: #{tpu_custom_call.1} parent=28 // pred_region
            loop: start=0, step=1, limit=1
            $region45: #{tpu_custom_call.1} parent=43 // loop_pre_header
              _
            $region46: #{tpu_custom_call.1} parent=43 // loop_header
              %s174 = sphi 0, %s178
              %p175 = scmp.ge.s32.totalorder %s174, 1
              %s179 = sphi [#allocation5], [#allocation5]
              %s180 = sphi %s3, %s3
            $region47: #{tpu_custom_call.1} parent=43 // loop_header_branch
              %177 = sbr.rel (%p175) target = $region51
            $region48: #{tpu_custom_call.1} parent=43 // loop_body
              %v181 = vld [vmem:[%s179] sm:$0xff]
              %182 = vst [vmem:[%s180] sm:$0xff] %v181
            $region49: #{tpu_custom_call.1} parent=43 // loop_footer
              %s178 = sadd.s32 1, %s174
            $region50: #{tpu_custom_call.1} parent=43 // loop_footer_branch
              %173 = sbr.rel target = $region46
            $region51: #{tpu_custom_call.1} parent=43 // loop_exit
              _
          $region44: #{tpu_custom_call.1} parent=28 // pred_fallthru
            _
          // Predicated region
          $region52: #{tpu_custom_call.1} parent=28 // pred_check
            _
          $region53: #{tpu_custom_call.1} parent=28 // pred_check_branch
            %184 = sbr.rel target = $region55
          $region54: #{tpu_custom_call.1} parent=28 // pred_region
            _
          $region55: #{tpu_custom_call.1} parent=28 // pred_fallthru
            _
        $region29: #{tpu_custom_call.1} parent=24 // pred_fallthru
          _
        // Predicated region
        $region30: #{tpu_custom_call.1} parent=24 // pred_check
          _
        $region31: #{tpu_custom_call.1} parent=24 // pred_check_branch
          %159 = sbr.rel target = $region33
        $region32: #{tpu_custom_call.1} parent=24 // pred_region
          loop: start=0, step=1, limit=1
          $region34: #{tpu_custom_call.1} parent=32 // loop_pre_header
            _
          $region35: #{tpu_custom_call.1} parent=32 // loop_header
            %s162 = sphi 0, %s166
            %p163 = scmp.ge.s32.totalorder %s162, 1
            %s167 = sphi [#allocation5], [#allocation5]
            %s168 = sphi %s3, %s3
          $region36: #{tpu_custom_call.1} parent=32 // loop_header_branch
            %165 = sbr.rel (%p163) target = $region40
          $region37: #{tpu_custom_call.1} parent=32 // loop_body
            %v169 = vld [vmem:[%s167] sm:$0xff]
            %170 = vst [vmem:[%s168] sm:$0xff] %v169
          $region38: #{tpu_custom_call.1} parent=32 // loop_footer
            %s166 = sadd.s32 1, %s162
          $region39: #{tpu_custom_call.1} parent=32 // loop_footer_branch
            %161 = sbr.rel target = $region35
          $region40: #{tpu_custom_call.1} parent=32 // loop_exit
            _
        $region33: #{tpu_custom_call.1} parent=24 // pred_fallthru
          _
      $region25: #{tpu_custom_call.1} parent=20 // pred_fallthru
        _
      %185 = vnop
    $region21: #{tpu_custom_call.1} parent=1 // pred_fallthru
      _
    // Predicated region
    $region56: #{tpu_custom_call.1} parent=1 // pred_check
      _
    $region57: #{tpu_custom_call.1} parent=1 // pred_check_branch
      %187 = sbr.rel (0) target = $region59
    $region58: #{tpu_custom_call.1} parent=1 // pred_region
      _
    $region59: #{tpu_custom_call.1} parent=1 // pred_fallthru
      _
    %188 = vsyncpa [#allocation4], 1

</llo_original>
